<compile_context>
chip_gen: v5e
topology: v5e:2x2
jax: 0.10.0
libtpu: 0.0.40
codegen_flags: <defaults>
</compile_context>

<pallas_src>
import jax
import jax.numpy as jnp
from jax.experimental import pallas as pl
from jax.experimental.pallas import tpu as pltpu


LANES = 128            # vreg lane width (last dim)
SUBLANES = 8           # f32 sublane count (second-to-last dim)
MAX_BLOCK_ROWS = 2048  # 2048 x 128 x 4 B = 1 MiB per block buffer
SMALL_BYTES = 1 << 20  # below this, plain jnp beats a kernel launch


def _cdiv(a, b):
    return -(-a // b)


def _round_up(a, b):
    return _cdiv(a, b) * b


def linear_kernel(w_ref, b_ref, x_ref, o_ref):
    # w_ref, b_ref: (1,) f32 scalars in SMEM.
    # x_ref, o_ref: (block_rows, 128) tiles in VMEM.
    w = w_ref[0]
    b = b_ref[0]
    # Pure VPU fused multiply-add in f32; cast only on the store.
    o_ref[...] = (x_ref[...].astype(jnp.float32) * w + b).astype(o_ref.dtype)


def _choose_block_rows(rows):
    """Pick a lane-dense block height.

    * <= MAX_BLOCK_ROWS (1 MiB/buffer) so double-buffered in+out stays well
      inside every generation's default scoped-VMEM budget (incl. v5e 16 MiB).
    * multiple of 8 (f32 sublane tiling) unless it equals the full extent.
    * <= ceil(rows/2) whenever rows > 8 so the "parallel" grid has >= 2 steps
      and v7x's two TensorCores both get work.
    """
    if rows <= SUBLANES:
        return rows                        # single block == full extent
    half = _round_up(_cdiv(rows, 2), SUBLANES)
    return max(SUBLANES, min(MAX_BLOCK_ROWS, half))


def _pallas_fma(x2d, w_s, b_s, *, alias_input):
    rows = x2d.shape[0]
    block_rows = _choose_block_rows(rows)
    grid = (_cdiv(rows, block_rows),)      # partial last block is auto-masked
    return pl.pallas_call(
        linear_kernel,
        out_shape=jax.ShapeDtypeStruct((rows, LANES), x2d.dtype),
        grid=grid,
        in_specs=[
            pl.BlockSpec(memory_space=pltpu.MemorySpace.SMEM),    # weight
            pl.BlockSpec(memory_space=pltpu.MemorySpace.SMEM),    # bias
            pl.BlockSpec((block_rows, LANES), lambda i: (i, 0)),  # x tile
        ],
        out_specs=pl.BlockSpec((block_rows, LANES), lambda i: (i, 0)),
        # Footprint-only optimization (every block is still DMA'd both ways);
        # only enabled when x2d is a temporary this wrapper owns.
        input_output_aliases={2: 0} if alias_input else {},
        compiler_params=pltpu.CompilerParams(
            dimension_semantics=("parallel",),
        ),
    )(w_s, b_s, x2d)


def linear_forward(x, weight, bias, *, force_pallas=False):
    """Equivalent of torch.nn.Linear(1, 1): y = x @ W^T + b == x * w + b.

    x: (..., 1) array; weight: (1, 1); bias: (1,). Returns same shape as x.
    """
    orig_shape = x.shape
    n = x.size                                    # in_features == out_features == 1
    dtype = x.dtype

    # Parameters stay f32 (matches PyTorch's f32 Linear even for low-precision
    # activations); activations are cast only when stored.
    w_s = weight.reshape(-1).astype(jnp.float32)  # (1,)
    b_s = bias.reshape(-1).astype(jnp.float32)    # (1,)

    # Small-problem fast path: launch overhead dwarfs one vreg of VPU work.
    if not force_pallas and n * x.dtype.itemsize < SMALL_BYTES:
        y = x.astype(jnp.float32) * w_s[0] + b_s[0]
        return y.astype(dtype).reshape(orig_shape)

    x_flat = x.reshape(-1)

    if n % LANES == 0:
        # Metadata-only reshape to a lane-dense slab: no pad, no tail slice.
        rows = n // LANES
        out2d = _pallas_fma(x_flat.reshape(rows, LANES), w_s, b_s,
                            alias_input=False)
        return out2d.reshape(orig_shape)

    # Ragged batch: pad only the tail up to the next lane multiple.
    # TODO(synk): for very large ragged batches this costs one extra HBM pass
    # each way; writing straight into the unpadded output would require a
    # lane-dense view of a ragged (n, 1) tensor, which does not exist.
    rows = _cdiv(n, LANES)
    padded = rows * LANES
    x2d = jnp.pad(x_flat, (0, padded - n)).reshape(rows, LANES)
    out2d = _pallas_fma(x2d, w_s, b_s, alias_input=True)
    return out2d.reshape(-1)[:n].reshape(orig_shape)


if __name__ == "__main__":
    key = jax.random.PRNGKey(0)
    k_x, k_w, k_b = jax.random.split(key, 3)

    weight = jax.random.uniform(k_w, (1, 1), dtype=jnp.float32,
                                minval=-1.0, maxval=1.0)
    bias = jax.random.uniform(k_b, (1,), dtype=jnp.float32,
                              minval=-1.0, maxval=1.0)

    def reference(x):
        return x @ weight.T + bias

    # 1) Small ragged batch forced through the Pallas kernel (padded-slab path).
    x_small = jax.random.normal(k_x, (8, 1), dtype=jnp.float32)
    y_small = linear_forward(x_small, weight, bias, force_pallas=True)
    jax.block_until_ready(y_small)
    assert y_small.shape == (8, 1)
    assert jnp.allclose(y_small, reference(x_small), atol=1e-6, rtol=1e-6)

    # 2) Lane-aligned batch -> zero-copy reshape path, 2-step parallel grid.
    x_big = jax.random.normal(k_x, (2048, 1), dtype=jnp.float32)
    y_big = linear_forward(x_big, weight, bias, force_pallas=True)
    jax.block_until_ready(y_big)
    assert y_big.shape == (2048, 1)
    assert jnp.allclose(y_big, reference(x_big), atol=1e-6, rtol=1e-6)

    # 3) Default small-batch fast path (no kernel launch).
    y_fast = linear_forward(x_small, weight, bias)
    jax.block_until_ready(y_fast)
    assert jnp.allclose(y_fast, reference(x_small), atol=1e-6, rtol=1e-6)

    print("KERNEL_OK")
</pallas_src>

<mosaic_0001>
module attributes {stable_mosaic.version = 11 : i64} {
  func.func @linear_kernel(%arg0: i32, %arg1: memref<1xf32, #tpu.memory_space<smem>>, %arg2: memref<1xf32, #tpu.memory_space<smem>>, %arg3: memref<1x128xf32, #tpu.memory_space<vmem>>, %arg4: memref<1x128xf32, #tpu.memory_space<vmem>>) attributes {dimension_semantics = [#tpu.dimension_semantics<parallel>], iteration_bounds = array<i64: 1>, scalar_prefetch = 0 : i64, scratch_operands = 0 : i64, tpu.core_type = #tpu.core_type<tc>, window_params = [{transform_indices = @transform_0, window_bounds = array<i64: 1>}, {transform_indices = @transform_1, window_bounds = array<i64: 1>}, {transform_indices = @transform_2, window_bounds = array<i64: 1, 128>}, {transform_indices = @transform_3, window_bounds = array<i64: 1, 128>}]} {
    %c0 = arith.constant 0 : index
    %0 = memref.load %arg1[%c0] : memref<1xf32, #tpu.memory_space<smem>>
    %c0_0 = arith.constant 0 : index
    %1 = memref.load %arg2[%c0_0] : memref<1xf32, #tpu.memory_space<smem>>
    %c0_1 = arith.constant 0 : index
    %c0_2 = arith.constant 0 : index
    %2 = vector.load %arg3[%c0_1, %c0_2] : memref<1x128xf32, #tpu.memory_space<vmem>>, vector<1x128xf32>
    %3 = vector.broadcast %0 : f32 to vector<1x128xf32>
    %4 = arith.mulf %2, %3 : vector<1x128xf32>
    %5 = vector.broadcast %1 : f32 to vector<1x128xf32>
    %6 = arith.addf %4, %5 : vector<1x128xf32>
    %c0_3 = arith.constant 0 : index
    %c0_4 = arith.constant 0 : index
    %7 = vector.load %arg4[%c0_3, %c0_4] : memref<1x128xf32, #tpu.memory_space<vmem>>, vector<1x128xf32>
    tpu.vector_store %arg4[%c0_3, %c0_4], %6 {strides = array<i32>} : memref<1x128xf32, #tpu.memory_space<vmem>>, vector<1x128xf32>,
    return
  }
  func.func @transform_0(%arg0: i32) -> i32 {
    %c0_i32 = arith.constant 0 : i32
    %c0_i32_0 = arith.constant 0 : i32
    return %c0_i32 : i32
  }
  func.func @transform_1(%arg0: i32) -> i32 {
    %c0_i32 = arith.constant 0 : i32
    %c0_i32_0 = arith.constant 0 : i32
    return %c0_i32 : i32
  }
  func.func @transform_2(%arg0: i32) -> (i32, i32) {
    %c0_i32 = arith.constant 0 : i32
    %c0_i32_0 = arith.constant 0 : i32
    return %arg0, %c0_i32 : i32, i32
  }
  func.func @transform_3(%arg0: i32) -> (i32, i32) {
    %c0_i32 = arith.constant 0 : i32
    %c0_i32_0 = arith.constant 0 : i32
    return %arg0, %c0_i32 : i32, i32
  }
}

</mosaic_0001>

<llo_original>
// kernel: tpu_custom_call.1
$region0: #{tpu_custom_call.1}
  #allocation0 [shape = 'u32[]', space=smem, size = 0x4, offset = 0x4, fixed_abs, tag = 'smem constant byte address 0x4 - core index']
  #allocation1 [shape = 'u32[72,128]{1,0:T(1,128)}', space=vmem, size = 0x9000, scoped, tag = 'internal scratch']
  #allocation2 [shape = 'f32[1]{0:T(128)S(6)}', space=smem, size = 0x200, scoped, tag = 'scoped memory for tpu_custom_call.1']
  #allocation3 [shape = 'f32[1]{0:T(128)S(6)}', space=smem, size = 0x200, scoped, tag = 'scoped memory for tpu_custom_call.1']
  %s0 = inlined_call_operand.<no memory space> [shape: f32[1], index: 0, kind: input, shape index: {}]
  %s1 = inlined_call_operand.<no memory space> [shape: f32[1], index: 1, kind: input, shape index: {}]
  %s2 = inlined_call_operand.hbm [shape: f32[1,128], index: 2, kind: input, shape index: {}, may-alias: {2,3}]
  %s3 = inlined_call_operand.hbm [shape: f32[1,128], index: 3, kind: output, shape index: {}, may-alias: {2,3}]
  %s4 = sld [smem:[#allocation0]]
  $region26: #{tpu_custom_call.1} parent=0
    _
  %s6 = ssub.s32 1, %s4
  %s7 = scalar_select 0, %s6, %s4
  %8 = sst [smem:[#allocation2]] %s0
  %9 = sst [smem:[#allocation3]] %s1
  $region1: #{tpu_custom_call.1} parent=0
    #allocation4 [shape = 'u8[512]{0}', space=vmem, size = 0x400, scoped, tag = 'input window, operand 2, single buffered']
    #allocation5 [shape = 's32[1]{0}', space=sflag, size = 0x4, scoped, tag = 'scoped memory for tpu_custom_call.1']
    #allocation6 [shape = 's32[1]{0}', space=sflag, size = 0x4, scoped, tag = 'scoped memory for tpu_custom_call.1']
    #allocation7 [shape = 'u8[512]{0}', space=vmem, size = 0x400, scoped, tag = 'output window, operand 0, single buffered']
    %10 = vsyncpa [#allocation5], 0
    %11 = vsyncpa [#allocation6], 0
    // Predicated region
    $region2: #{tpu_custom_call.1} parent=1 // pred_check
      _
    $region3: #{tpu_custom_call.1} parent=1 // pred_check_branch
      %13 = sbr.rel (0) target = $region5
    $region4: #{tpu_custom_call.1} parent=1 // pred_region
      _
    $region5: #{tpu_custom_call.1} parent=1 // pred_fallthru
      _
    // Predicated region
    $region6: #{tpu_custom_call.1} parent=1 // pred_check
      _
    $region7: #{tpu_custom_call.1} parent=1 // pred_check_branch
      %15 = sbr.rel (0) target = $region9
    $region8: #{tpu_custom_call.1} parent=1 // pred_region
      _
    $region9: #{tpu_custom_call.1} parent=1 // pred_fallthru
      _
    // Predicated region
    $region10: #{tpu_custom_call.1} parent=1 // pred_check
      _
    $region11: #{tpu_custom_call.1} parent=1 // pred_check_branch
      %17 = sbr.rel (0) target = $region13
    $region12: #{tpu_custom_call.1} parent=1 // pred_region
      %19 = vsyncadd [#allocation5], 0
      %s21 = sshll.u32 %s2, 4
      %s22 = int_to_ptr.hbm [resolvable:$true] %s21
      %s23 = sshll.u32 [#allocation4], 4
      %s24 = int_to_ptr.vmem [resolvable:$true] %s23
      %26 = dma.hbm_to_vmem [thread:$0]  %s22, 16, %s24, [#allocation5]
    $region13: #{tpu_custom_call.1} parent=1 // pred_fallthru
      _
    // Predicated region
    $region14: #{tpu_custom_call.1} parent=1 // pred_check
      _
    $region15: #{tpu_custom_call.1} parent=1 // pred_check_branch
      %28 = sbr.rel (0) target = $region17
    $region16: #{tpu_custom_call.1} parent=1 // pred_region
      %30 = dma.done [#allocation5], 16
    $region17: #{tpu_custom_call.1} parent=1 // pred_fallthru
      _
    %s31 = sld [smem:[#allocation2]]
    %s32 = sld [smem:[#allocation3]]
    %v33 = vld [vmem:[#allocation4] sm:$0x1]
    %v34 = vstv %s31
    %v35 = vmul.f32 %v33, %v34
    %v36 = vstv %s32
    %v37 = vadd.f32 %v35, %v36
    %38 = vst [vmem:[#allocation7] sm:$0x1] %v37
    // Predicated region
    $region18: #{tpu_custom_call.1} parent=1 // pred_check
      _
    $region19: #{tpu_custom_call.1} parent=1 // pred_check_branch
      %40 = sbr.rel (0) target = $region21
    $region20: #{tpu_custom_call.1} parent=1 // pred_region
      %42 = vsyncadd [#allocation6], 0
      %s44 = sshll.u32 [#allocation7], 4
      %s45 = int_to_ptr.vmem [resolvable:$true] %s44
      %s46 = sshll.u32 %s3, 4
      %s47 = int_to_ptr.hbm [resolvable:$true] %s46
      %49 = dma.vmem_to_hbm [thread:$0]  %s45, 16, %s47, [#allocation6]
    $region21: #{tpu_custom_call.1} parent=1 // pred_fallthru
      _
    // Predicated region
    $region22: #{tpu_custom_call.1} parent=1 // pred_check
      _
    $region23: #{tpu_custom_call.1} parent=1 // pred_check_branch
      %51 = sbr.rel (0) target = $region25
    $region24: #{tpu_custom_call.1} parent=1 // pred_region
      %53 = dma.done [#allocation6], 16
    $region25: #{tpu_custom_call.1} parent=1 // pred_fallthru
      _
    %54 = vsyncpa [#allocation5], 1
    %55 = vsyncpa [#allocation6], 1

</llo_original>
